<compile_context>
chip_gen: v7x
topology: tpu7x:2x2x1
jax: 0.10.0
libtpu: 0.0.40
codegen_flags: <defaults>
</compile_context>

<pallas_src>
import jax
import jax.numpy as jnp
from jax import lax
from jax.experimental import pallas as pl
from jax.experimental.pallas import tpu as pltpu


def transformer_block_kernel(x_ref, wqkv_ref, w0t_ref, wcomb_ref, out_ref):
    # x_ref:     (B, S, E)  token+positional embeddings, f32
    # wqkv_ref:  (E, 3E)    [Wq^T | Wk^T | Wv^T], pre-transposed + fused
    # w0t_ref:   (E, H)     FF layer0 weight, pre-transposed (H = 4E)
    # wcomb_ref: (A, H)     tok_emb @ W1  (fuses FF layer1 with the logit projection)
    # out_ref:   (B, S, A)  logits, transposed to (B, A, S) in the wrapper
    x = x_ref[...]                                                    # (B, S, E)
    e = x.shape[-1]

    # --- fused QKV projection: one (B,S,E) x (E,3E) MXU matmul ---
    qkv = lax.dot_general(x, wqkv_ref[...],
                          dimension_numbers=(((2,), (0,)), ((), ())),
                          preferred_element_type=jnp.float32)         # (B, S, 3E)
    q = qkv[..., 0 * e:1 * e]
    k = qkv[..., 1 * e:2 * e]
    v = qkv[..., 2 * e:3 * e]

    # --- SingleHeadAttention (no softmax, no scaling, per the reference module) ---
    dot = jnp.einsum('bse,bte->bst', q, k,
                     preferred_element_type=jnp.float32)              # (B, S, S)
    y = jnp.einsum('bst,bte->bse', dot, v,
                   preferred_element_type=jnp.float32)                # (B, S, E)

    # --- FeedForwardRelu, first layer ---
    h = jnp.maximum(
        lax.dot_general(y, w0t_ref[...],
                        dimension_numbers=(((2,), (0,)), ((), ())),
                        preferred_element_type=jnp.float32),
        0.0)                                                          # (B, S, H)

    # --- fused (layer1 + logit projection): logits[b,s,a] = sum_h h[b,s,h] wcomb[a,h]
    out_ref[...] = lax.dot_general(h, wcomb_ref[...],
                                   dimension_numbers=(((2,), (1,)), ((), ())),
                                   preferred_element_type=jnp.float32)  # (B, S, A)


def basic_transformer_block(input_ids, params):
    tok_emb = params["tok_emb"]   # (A, E)
    pos_emb = params["pos_emb"]   # (S, E)
    B, S = input_ids.shape
    A, E = tok_emb.shape
    H = 4 * E

    # Glue / layout plumbing kept in plain JAX (fused by XLA around the kernel).
    x = tok_emb[input_ids] + pos_emb[None, :, :]                       # (B, S, E)
    wqkv_t = jnp.concatenate(
        [params["wq"].T, params["wk"].T, params["wv"].T], axis=1)      # (E, 3E)
    w0_t = params["w0"].T                                              # (E, H)
    w_comb = tok_emb @ params["w1"]                                    # (A, H)

    flops = 2 * B * S * (E * 3 * E + S * E + S * E + E * H + H * A)
    bytes_accessed = 4 * (B * S * E + E * 3 * E + E * H + A * H + B * S * A)

    out_bsa = pl.pallas_call(
        transformer_block_kernel,
        out_shape=jax.ShapeDtypeStruct((B, S, A), jnp.float32),
        in_specs=[pl.BlockSpec(memory_space=pltpu.MemorySpace.VMEM)] * 4,
        out_specs=pl.BlockSpec(memory_space=pltpu.MemorySpace.VMEM),
        cost_estimate=pl.CostEstimate(flops=flops, transcendentals=0,
                                      bytes_accessed=bytes_accessed),
    )(x, wqkv_t, w0_t, w_comb)

    # (B, S, A) -> (B, A, S), matching torch.bmm(W, X.transpose(1, 2)).
    return jnp.transpose(out_bsa, (0, 2, 1))
    # TODO(synk): at scaled-up shapes, add a parallel batch/row grid axis so the
    # second v7x TensorCore is used and weight specs get pipeline_mode=pl.Buffered(1).


def reference_forward(input_ids, params):
    tok_emb, pos_emb = params["tok_emb"], params["pos_emb"]
    x = tok_emb[input_ids] + pos_emb[None, :, :]
    q = x @ params["wq"].T
    k = x @ params["wk"].T
    v = x @ params["wv"].T
    dot = jnp.einsum("bse,bte->bst", q, k)
    y = jnp.einsum("bst,bte->bse", dot, v)
    h = jax.nn.relu(y @ params["w0"].T)
    f = h @ params["w1"].T
    return jnp.einsum("ae,bse->bas", tok_emb, f)


def init_params(key, alphabet_size, sequence_length):
    E = alphabet_size + sequence_length + 2
    H = 4 * E
    keys = jax.random.split(key, 7)
    scale = 0.1
    return {
        "tok_emb": scale * jax.random.normal(keys[0], (alphabet_size, E), jnp.float32),
        "pos_emb": scale * jax.random.normal(keys[1], (sequence_length, E), jnp.float32),
        "wq": scale * jax.random.normal(keys[2], (E, E), jnp.float32),
        "wk": scale * jax.random.normal(keys[3], (E, E), jnp.float32),
        "wv": scale * jax.random.normal(keys[4], (E, E), jnp.float32),
        "w0": scale * jax.random.normal(keys[5], (H, E), jnp.float32),
        "w1": scale * jax.random.normal(keys[6], (E, H), jnp.float32),
    }


if __name__ == "__main__":
    alphabet_size = 6
    sequence_length = 8
    batch = 2

    root = jax.random.PRNGKey(0)
    k_params, k_ids = jax.random.split(root)
    params = init_params(k_params, alphabet_size, sequence_length)
    input_ids = jax.random.randint(k_ids, (batch, sequence_length), 0, alphabet_size)

    forward = jax.jit(basic_transformer_block)
    out = forward(input_ids, params)
    out = jax.block_until_ready(out)

    ref = reference_forward(input_ids, params)
    assert out.shape == (batch, alphabet_size, sequence_length)
    assert jnp.allclose(out, ref, rtol=1e-4, atol=1e-5), "mismatch vs reference"

    print("KERNEL_OK")
</pallas_src>

<mosaic_0001>
module attributes {stable_mosaic.version = 11 : i64} {
  func.func @transformer_block_kernel(%arg0: memref<2x8x16xf32, #tpu.memory_space<vmem>>, %arg1: memref<16x48xf32, #tpu.memory_space<vmem>>, %arg2: memref<16x64xf32, #tpu.memory_space<vmem>>, %arg3: memref<6x64xf32, #tpu.memory_space<vmem>>, %arg4: memref<2x8x6xf32, #tpu.memory_space<vmem>>) attributes {dimension_semantics = [], scalar_prefetch = 0 : i64, scratch_operands = 0 : i64, tpu.core_type = #tpu.core_type<tc>} {
    %c0 = arith.constant 0 : index
    %c0_0 = arith.constant 0 : index
    %c0_1 = arith.constant 0 : index
    %0 = vector.load %arg0[%c0, %c0_0, %c0_1] : memref<2x8x16xf32, #tpu.memory_space<vmem>>, vector<2x8x16xf32>
    %c0_2 = arith.constant 0 : index
    %c0_3 = arith.constant 0 : index
    %1 = vector.load %arg1[%c0_2, %c0_3] : memref<16x48xf32, #tpu.memory_space<vmem>>, vector<16x48xf32>
    %cst = arith.constant dense<0.000000e+00> : vector<2x8x48xf32>
    %2 = tpu.matmul %0, %1, %cst {dimension_numbers = #tpu.dot_dimension_numbers<[2], [0], [0, 1], [1], [0, 0, 0, 1, 1, 1], [], []>} : vector<2x8x16xf32>, vector<16x48xf32>, vector<2x8x48xf32> -> vector<2x8x48xf32>
    %3 = vector.extract_strided_slice %2 {offsets = [0, 0, 0], sizes = [2, 8, 16], strides = [1, 1, 1]} : vector<2x8x48xf32> to vector<2x8x16xf32>
    %4 = vector.extract_strided_slice %2 {offsets = [0, 0, 16], sizes = [2, 8, 16], strides = [1, 1, 1]} : vector<2x8x48xf32> to vector<2x8x16xf32>
    %5 = vector.extract_strided_slice %2 {offsets = [0, 0, 32], sizes = [2, 8, 16], strides = [1, 1, 1]} : vector<2x8x48xf32> to vector<2x8x16xf32>
    "tpu.trace_start"() <{level = 10 : i32, message = "bse,bte->bst"}> : () -> ()
    %cst_4 = arith.constant dense<0.000000e+00> : vector<2x8x8xf32>
    %6 = tpu.matmul %3, %4, %cst_4 {dimension_numbers = #tpu.dot_dimension_numbers<[2], [2], [1], [1], [0, 0, 0, 1, 1, 1], [0], [0]>} : vector<2x8x16xf32>, vector<2x8x16xf32>, vector<2x8x8xf32> -> vector<2x8x8xf32>
    "tpu.trace_stop"() : () -> ()
    "tpu.trace_start"() <{level = 10 : i32, message = "bst,bte->bse"}> : () -> ()
    %cst_5 = arith.constant dense<0.000000e+00> : vector<2x8x16xf32>
    %7 = tpu.matmul %6, %5, %cst_5 {dimension_numbers = #tpu.dot_dimension_numbers<[2], [1], [1], [2], [0, 0, 0, 1, 1, 2], [0], [0]>} : vector<2x8x8xf32>, vector<2x8x16xf32>, vector<2x8x16xf32> -> vector<2x8x16xf32>
    "tpu.trace_stop"() : () -> ()
    %c0_6 = arith.constant 0 : index
    %c0_7 = arith.constant 0 : index
    %8 = vector.load %arg2[%c0_6, %c0_7] : memref<16x64xf32, #tpu.memory_space<vmem>>, vector<16x64xf32>
    %cst_8 = arith.constant dense<0.000000e+00> : vector<2x8x64xf32>
    %9 = tpu.matmul %7, %8, %cst_8 {dimension_numbers = #tpu.dot_dimension_numbers<[2], [0], [0, 1], [1], [0, 0, 0, 1, 1, 1], [], []>} : vector<2x8x16xf32>, vector<16x64xf32>, vector<2x8x64xf32> -> vector<2x8x64xf32>
    %cst_9 = arith.constant 0.000000e+00 : f32
    %10 = vector.broadcast %cst_9 : f32 to vector<2x8x64xf32>
    %11 = arith.maximumf %9, %10 : vector<2x8x64xf32>
    %c0_10 = arith.constant 0 : index
    %c0_11 = arith.constant 0 : index
    %12 = vector.load %arg3[%c0_10, %c0_11] : memref<6x64xf32, #tpu.memory_space<vmem>>, vector<6x64xf32>
    %cst_12 = arith.constant dense<0.000000e+00> : vector<2x8x6xf32>
    %13 = tpu.matmul %11, %12, %cst_12 {dimension_numbers = #tpu.dot_dimension_numbers<[2], [1], [0, 1], [0], [0, 0, 0, 1, 1, 0], [], []>} : vector<2x8x64xf32>, vector<6x64xf32>, vector<2x8x6xf32> -> vector<2x8x6xf32>
    %c0_13 = arith.constant 0 : index
    %c0_14 = arith.constant 0 : index
    %c0_15 = arith.constant 0 : index
    %14 = vector.load %arg4[%c0_13, %c0_14, %c0_15] : memref<2x8x6xf32, #tpu.memory_space<vmem>>, vector<2x8x6xf32>
    tpu.vector_store %arg4[%c0_13, %c0_14, %c0_15], %13 {strides = array<i32>} : memref<2x8x6xf32, #tpu.memory_space<vmem>>, vector<2x8x6xf32>,
    return
  }
}

</mosaic_0001>

<llo_original>
// kernel: basic_transformer_block.1
$region0: #{basic_transformer_block.1}
  #allocation0 [shape = 'u32[]', space=smem, size = 0x4, offset = 0x4, fixed_abs, tag = 'smem constant byte address 0x4 - core index']
  #allocation1 [shape = 'u32[144,128]{1,0:T(1,128)}', space=vmem, size = 0x12000, scoped, tag = 'internal scratch']
  %s0 = inlined_call_operand.vmem [shape: f32[2,8,16], index: 0, kind: input, shape index: {}]
  %s1 = inlined_call_operand.vmem [shape: f32[16,48], index: 1, kind: input, shape index: {}]
  %s2 = inlined_call_operand.vmem [shape: f32[16,64], index: 2, kind: input, shape index: {}]
  %s3 = inlined_call_operand.vmem [shape: f32[6,64], index: 3, kind: input, shape index: {}]
  %s4 = inlined_call_operand.vmem [shape: f32[2,8,6], index: 4, kind: output, shape index: {}]
  %s5 = sld [smem:[#allocation0]]
  $region26: #{basic_transformer_block.1} parent=0
    _
  %s7 = ssub.s32 1, %s5
  %s8 = scalar_select 0, %s7, %s5
  // Predicated region
  $region2: #{basic_transformer_block.1} parent=0 // pred_check
    _
  $region3: #{basic_transformer_block.1} parent=0 // pred_check_branch
    %10 = sbr.rel (0) target = $region5
  $region4: #{basic_transformer_block.1} parent=0 // pred_region
    _
  $region5: #{basic_transformer_block.1} parent=0 // pred_fallthru
    _
  // Predicated region
  $region6: #{basic_transformer_block.1} parent=0 // pred_check
    _
  $region7: #{basic_transformer_block.1} parent=0 // pred_check_branch
    %12 = sbr.rel (0) target = $region9
  $region8: #{basic_transformer_block.1} parent=0 // pred_region
    _
  $region9: #{basic_transformer_block.1} parent=0 // pred_fallthru
    _
  // Predicated region
  $region10: #{basic_transformer_block.1} parent=0 // pred_check
    _
  $region11: #{basic_transformer_block.1} parent=0 // pred_check_branch
    %14 = sbr.rel (0) target = $region13
  $region12: #{basic_transformer_block.1} parent=0 // pred_region
    _
  $region13: #{basic_transformer_block.1} parent=0 // pred_fallthru
    _
  // Predicated region
  $region14: #{basic_transformer_block.1} parent=0 // pred_check
    _
  $region15: #{basic_transformer_block.1} parent=0 // pred_check_branch
    %16 = sbr.rel (0) target = $region17
  $region16: #{basic_transformer_block.1} parent=0 // pred_region
    _
  $region17: #{basic_transformer_block.1} parent=0 // pred_fallthru
    _
  %v17 = vld [vmem:[%s0] sm:$0xff]
  %v18 = vld [vmem:[%s0 + $0x8] sm:$0xff]
  %v19 = vld [vmem:[%s1] sm:$0xff]
  %v20 = vld [vmem:[%s1 + $0x8] sm:$0xff]
  %vm21 = vcmask 130048
  %v23 = vsel %vm21, %v17, 0
  %v26 = vsel %vm21, %v18, 0
  %28 = vmatprep.subr.mxu0 0.0
  %29 = vmatpush1.msra.mxu0 %v19
  %30 = vmatprep.subr.mxu0 0.0
  %31 = vmatpush1.msra.mxu0 %v20
  %32 = vmatprep.subr.mxu0 0.0
  %33 = vmatpush1.msra.mxu0 0.0
  %34 = vmatprep.subr.mxu0 0.0
  %35 = vmatpush1.msra.mxu0 0.0
  %36 = vmatprep.subr.mxu0 0.0
  %37 = vmatpush1.msra.mxu0 0.0
  %38 = vmatprep.subr.mxu0 0.0
  %39 = vmatpush1.msra.mxu0 0.0
  %40 = vmatprep.subr.mxu0 0.0
  %41 = vmatpush1.msra.mxu0 0.0
  %42 = vmatprep.subr.mxu0 0.0
  %43 = vmatpush1.msra.mxu0 0.0
  %44 = vmatprep.subr.mxu0 0.0
  %45 = vmatpush1.msra.mxu0 0.0
  %46 = vmatprep.subr.mxu0 0.0
  %47 = vmatpush1.msra.mxu0 0.0
  %48 = vmatprep.subr.mxu0 0.0
  %49 = vmatpush1.msra.mxu0 0.0
  %50 = vmatprep.subr.mxu0 0.0
  %51 = vmatpush1.msra.mxu0 0.0
  %52 = vmatprep.subr.mxu0 0.0
  %53 = vmatpush1.msra.mxu0 0.0
  %54 = vmatprep.subr.mxu0 0.0
  %55 = vmatpush1.msra.mxu0 0.0
  %56 = vmatprep.subr.mxu0 0.0
  %57 = vmatpush1.msra.mxu0 0.0
  %58 = vmatprep.subr.mxu0 0.0
  %59 = vmatpush1.msra.mxu0 0.0
  %60 = vmatprep.subr.mxu0 0.0
  %61 = vmatpush1.msra.mxu0 0.0
  %62 = vmatprep.subr.mxu0 0.0
  %63 = vmatpush1.msra.mxu0 0.0
  %64 = vmatprep.subr.mxu0 0.0
  %65 = vmatpush1.msra.mxu0 0.0
  %66 = vmatprep.subr.mxu0 0.0
  %67 = vmatpush1.msra.mxu0 0.0
  %68 = vmatprep.subr.mxu0 0.0
  %69 = vmatpush1.msra.mxu0 0.0
  %70 = vmatprep.subr.mxu0 0.0
  %71 = vmatpush1.msra.mxu0 0.0
  %72 = vmatprep.subr.mxu0 0.0
  %73 = vmatpush1.msra.mxu0 0.0
  %74 = vmatprep.subr.mxu0 0.0
  %75 = vmatpush1.msra.mxu0 0.0
  %76 = vmatprep.subr.mxu0 0.0
  %77 = vmatpush1.msra.mxu0 0.0
  %78 = vmatprep.subr.mxu0 0.0
  %79 = vmatpush1.msra.mxu0 0.0
  %80 = vmatprep.subr.mxu0 0.0
  %81 = vmatpush1.msra.mxu0 0.0
  %82 = vmatprep.subr.mxu0 0.0
  %83 = vmatpush1.msra.mxu0 0.0
  %84 = vmatprep.subr.mxu0 0.0
  %85 = vmatpush1.msra.mxu0 0.0
  %86 = vmatprep.subr.mxu0 0.0
  %87 = vmatpush1.msra.mxu0 0.0
  %88 = vmatprep.subr.mxu0 0.0
  %89 = vmatpush1.msra.mxu0 0.0
  %90 = vmatprep.subr.mxu0 0.0
  %91 = vmatpush1.msra.mxu0 0.0
  %92 = vmatprep.mubr.f32.mxu0 0.0
  %93 = vmatmul.mubr.f32.gmra.mrb[0].mxu0 %v23
  %v94 = vpop.f32.mrb[0].mxu0
  %v95 = vadd.f32 0.0, %v94
  %v96 = vpop.f32.mrb[0].mxu0
  %97 = vmatprep.mubr.f32.mxu0 0.0
  %98 = vmatmul.mubr.f32.gmra.mrb[0].mxu0 %v26
  %v99 = vpop.f32.mrb[0].mxu0
  %v100 = vadd.f32 0.0, %v99
  %v101 = vpop.f32.mrb[0].mxu0
  %102 = vdwg.mxu0
  %104 = vrot.lane.b32.xlu0 %v95, 112
  %v105 = vpop.permute.xlu0 %104
  %v106 = vsel %vm21, %v95, 0
  %v108 = vsel %vm21, %v105, 0
  %110 = vmatprep.subr.mxu0 0.0
  %111 = vmatpush1.xpose.msra.mxu0 %v108
  %112 = vmatprep.subr.mxu0 0.0
  %113 = vmatpush1.xpose.msra.mxu0 0.0
  %114 = vmatprep.subr.mxu0 0.0
  %115 = vmatpush1.xpose.msra.mxu0 0.0
  %116 = vmatprep.subr.mxu0 0.0
  %117 = vmatpush1.xpose.msra.mxu0 0.0
  %118 = vmatprep.subr.mxu0 0.0
  %119 = vmatpush1.xpose.msra.mxu0 0.0
  %120 = vmatprep.subr.mxu0 0.0
  %121 = vmatpush1.xpose.msra.mxu0 0.0
  %122 = vmatprep.subr.mxu0 0.0
  %123 = vmatpush1.xpose.msra.mxu0 0.0
  %124 = vmatprep.subr.mxu0 0.0
  %125 = vmatpush1.xpose.msra.mxu0 0.0
  %126 = vmatprep.subr.mxu0 0.0
  %127 = vmatpush1.xpose.msra.mxu0 0.0
  %128 = vmatprep.subr.mxu0 0.0
  %129 = vmatpush1.xpose.msra.mxu0 0.0
  %130 = vmatprep.subr.mxu0 0.0
  %131 = vmatpush1.xpose.msra.mxu0 0.0
  %132 = vmatprep.subr.mxu0 0.0
  %133 = vmatpush1.xpose.msra.mxu0 0.0
  %134 = vmatprep.subr.mxu0 0.0
  %135 = vmatpush1.xpose.msra.mxu0 0.0
  %136 = vmatprep.subr.mxu0 0.0
  %137 = vmatpush1.xpose.msra.mxu0 0.0
  %138 = vmatprep.subr.mxu0 0.0
  %139 = vmatpush1.xpose.msra.mxu0 0.0
  %140 = vmatprep.subr.mxu0 0.0
  %141 = vmatpush1.xpose.msra.mxu0 0.0
  %142 = vmatprep.subr.mxu0 0.0
  %143 = vmatpush1.xpose.msra.mxu0 0.0
  %144 = vmatprep.subr.mxu0 0.0
  %145 = vmatpush1.xpose.msra.mxu0 0.0
  %146 = vmatprep.subr.mxu0 0.0
  %147 = vmatpush1.xpose.msra.mxu0 0.0
  %148 = vmatprep.subr.mxu0 0.0
  %149 = vmatpush1.xpose.msra.mxu0 0.0
  %150 = vmatprep.subr.mxu0 0.0
  %151 = vmatpush1.xpose.msra.mxu0 0.0
  %152 = vmatprep.subr.mxu0 0.0
  %153 = vmatpush1.xpose.msra.mxu0 0.0
  %154 = vmatprep.subr.mxu0 0.0
  %155 = vmatpush1.xpose.msra.mxu0 0.0
  %156 = vmatprep.subr.mxu0 0.0
  %157 = vmatpush1.xpose.msra.mxu0 0.0
  %158 = vmatprep.subr.mxu0 0.0
  %159 = vmatpush1.xpose.msra.mxu0 0.0
  %160 = vmatprep.subr.mxu0 0.0
  %161 = vmatpush1.xpose.msra.mxu0 0.0
  %162 = vmatprep.subr.mxu0 0.0
  %163 = vmatpush1.xpose.msra.mxu0 0.0
  %164 = vmatprep.subr.mxu0 0.0
  %165 = vmatpush1.xpose.msra.mxu0 0.0
  %166 = vmatprep.subr.mxu0 0.0
  %167 = vmatpush1.xpose.msra.mxu0 0.0
  %168 = vmatprep.subr.mxu0 0.0
  %169 = vmatpush1.xpose.msra.mxu0 0.0
  %170 = vmatprep.subr.mxu0 0.0
  %171 = vmatpush1.xpose.msra.mxu0 0.0
  %172 = vmatprep.subr.mxu0 0.0
  %173 = vmatpush1.xpose.msra.mxu0 0.0
  %174 = vmatprep.mubr.f32.mxu0 0.0
  %175 = vmatmul.mubr.f32.gmra.mrb[0].mxu0 %v106
  %v176 = vpop.f32.mrb[0].mxu0
  %v177 = vadd.f32 0.0, %v176
  %v178 = vpop.f32.mrb[0].mxu0
  %179 = vdwg.mxu0
  %181 = vrot.lane.b32.xlu0 %v100, 112
  %v182 = vpop.permute.xlu0 %181
  %v183 = vsel %vm21, %v100, 0
  %v185 = vsel %vm21, %v182, 0
  %187 = vmatprep.subr.mxu0 0.0
  %188 = vmatpush1.xpose.msra.mxu0 %v185
  %189 = vmatprep.subr.mxu0 0.0
  %190 = vmatpush1.xpose.msra.mxu0 0.0
  %191 = vmatprep.subr.mxu0 0.0
  %192 = vmatpush1.xpose.msra.mxu0 0.0
  %193 = vmatprep.subr.mxu0 0.0
  %194 = vmatpush1.xpose.msra.mxu0 0.0
  %195 = vmatprep.subr.mxu0 0.0
  %196 = vmatpush1.xpose.msra.mxu0 0.0
  %197 = vmatprep.subr.mxu0 0.0
  %198 = vmatpush1.xpose.msra.mxu0 0.0
  %199 = vmatprep.subr.mxu0 0.0
  %200 = vmatpush1.xpose.msra.mxu0 0.0
  %201 = vmatprep.subr.mxu0 0.0
  %202 = vmatpush1.xpose.msra.mxu0 0.0
  %203 = vmatprep.subr.mxu0 0.0
  %204 = vmatpush1.xpose.msra.mxu0 0.0
  %205 = vmatprep.subr.mxu0 0.0
  %206 = vmatpush1.xpose.msra.mxu0 0.0
  %207 = vmatprep.subr.mxu0 0.0
  %208 = vmatpush1.xpose.msra.mxu0 0.0
  %209 = vmatprep.subr.mxu0 0.0
  %210 = vmatpush1.xpose.msra.mxu0 0.0
  %211 = vmatprep.subr.mxu0 0.0
  %212 = vmatpush1.xpose.msra.mxu0 0.0
  %213 = vmatprep.subr.mxu0 0.0
  %214 = vmatpush1.xpose.msra.mxu0 0.0
  %215 = vmatprep.subr.mxu0 0.0
  %216 = vmatpush1.xpose.msra.mxu0 0.0
  %217 = vmatprep.subr.mxu0 0.0
  %218 = vmatpush1.xpose.msra.mxu0 0.0
  %219 = vmatprep.subr.mxu0 0.0
  %220 = vmatpush1.xpose.msra.mxu0 0.0
  %221 = vmatprep.subr.mxu0 0.0
  %222 = vmatpush1.xpose.msra.mxu0 0.0
  %223 = vmatprep.subr.mxu0 0.0
  %224 = vmatpush1.xpose.msra.mxu0 0.0
  %225 = vmatprep.subr.mxu0 0.0
  %226 = vmatpush1.xpose.msra.mxu0 0.0
  %227 = vmatprep.subr.mxu0 0.0
  %228 = vmatpush1.xpose.msra.mxu0 0.0
  %229 = vmatprep.subr.mxu0 0.0
  %230 = vmatpush1.xpose.msra.mxu0 0.0
  %231 = vmatprep.subr.mxu0 0.0
  %232 = vmatpush1.xpose.msra.mxu0 0.0
  %233 = vmatprep.subr.mxu0 0.0
  %234 = vmatpush1.xpose.msra.mxu0 0.0
  %235 = vmatprep.subr.mxu0 0.0
  %236 = vmatpush1.xpose.msra.mxu0 0.0
  %237 = vmatprep.subr.mxu0 0.0
  %238 = vmatpush1.xpose.msra.mxu0 0.0
  %239 = vmatprep.subr.mxu0 0.0
  %240 = vmatpush1.xpose.msra.mxu0 0.0
  %241 = vmatprep.subr.mxu0 0.0
  %242 = vmatpush1.xpose.msra.mxu0 0.0
  %243 = vmatprep.subr.mxu0 0.0
  %244 = vmatpush1.xpose.msra.mxu0 0.0
  %245 = vmatprep.subr.mxu0 0.0
  %246 = vmatpush1.xpose.msra.mxu0 0.0
  %247 = vmatprep.subr.mxu0 0.0
  %248 = vmatpush1.xpose.msra.mxu0 0.0
  %249 = vmatprep.subr.mxu0 0.0
  %250 = vmatpush1.xpose.msra.mxu0 0.0
  %251 = vmatprep.mubr.f32.mxu0 0.0
  %252 = vmatmul.mubr.f32.gmra.mrb[0].mxu0 %v183
  %v253 = vpop.f32.mrb[0].mxu0
  %v254 = vadd.f32 0.0, %v253
  %v255 = vpop.f32.mrb[0].mxu0
  %256 = vdwg.mxu0
  %257 = vrot.lane.b32.xlu0 %v95, 96
  %v258 = vpop.permute.xlu0 %257
  %vm260 = vcmask 64512
  %v262 = vsel %vm260, %v177, 0
  %264 = vmatprep.subr.mxu0 0.0
  %265 = vmatpush1.msra.mxu0 %v258
  %266 = vmatprep.subr.mxu0 0.0
  %267 = vmatpush1.msra.mxu0 0.0
  %268 = vmatprep.subr.mxu0 0.0
  %269 = vmatpush1.msra.mxu0 0.0
  %270 = vmatprep.subr.mxu0 0.0
  %271 = vmatpush1.msra.mxu0 0.0
  %272 = vmatprep.subr.mxu0 0.0
  %273 = vmatpush1.msra.mxu0 0.0
  %274 = vmatprep.subr.mxu0 0.0
  %275 = vmatpush1.msra.mxu0 0.0
  %276 = vmatprep.subr.mxu0 0.0
  %277 = vmatpush1.msra.mxu0 0.0
  %278 = vmatprep.subr.mxu0 0.0
  %279 = vmatpush1.msra.mxu0 0.0
  %280 = vmatprep.subr.mxu0 0.0
  %281 = vmatpush1.msra.mxu0 0.0
  %282 = vmatprep.subr.mxu0 0.0
  %283 = vmatpush1.msra.mxu0 0.0
  %284 = vmatprep.subr.mxu0 0.0
  %285 = vmatpush1.msra.mxu0 0.0
  %286 = vmatprep.subr.mxu0 0.0
  %287 = vmatpush1.msra.mxu0 0.0
  %288 = vmatprep.subr.mxu0 0.0
  %289 = vmatpush1.msra.mxu0 0.0
  %290 = vmatprep.subr.mxu0 0.0
  %291 = vmatpush1.msra.mxu0 0.0
  %292 = vmatprep.subr.mxu0 0.0
  %293 = vmatpush1.msra.mxu0 0.0
  %294 = vmatprep.subr.mxu0 0.0
  %295 = vmatpush1.msra.mxu0 0.0
  %296 = vmatprep.subr.mxu0 0.0
  %297 = vmatpush1.msra.mxu0 0.0
  %298 = vmatprep.subr.mxu0 0.0
  %299 = vmatpush1.msra.mxu0 0.0
  %300 = vmatprep.subr.mxu0 0.0
  %301 = vmatpush1.msra.mxu0 0.0
  %302 = vmatprep.subr.mxu0 0.0
  %303 = vmatpush1.msra.mxu0 0.0
  %304 = vmatprep.subr.mxu0 0.0
  %305 = vmatpush1.msra.mxu0 0.0
  %306 = vmatprep.subr.mxu0 0.0
  %307 = vmatpush1.msra.mxu0 0.0
  %308 = vmatprep.subr.mxu0 0.0
  %309 = vmatpush1.msra.mxu0 0.0
  %310 = vmatprep.subr.mxu0 0.0
  %311 = vmatpush1.msra.mxu0 0.0
  %312 = vmatprep.subr.mxu0 0.0
  %313 = vmatpush1.msra.mxu0 0.0
  %314 = vmatprep.subr.mxu0 0.0
  %315 = vmatpush1.msra.mxu0 0.0
  %316 = vmatprep.subr.mxu0 0.0
  %317 = vmatpush1.msra.mxu0 0.0
  %318 = vmatprep.subr.mxu0 0.0
  %319 = vmatpush1.msra.mxu0 0.0
  %320 = vmatprep.subr.mxu0 0.0
  %321 = vmatpush1.msra.mxu0 0.0
  %322 = vmatprep.subr.mxu0 0.0
  %323 = vmatpush1.msra.mxu0 0.0
  %324 = vmatprep.subr.mxu0 0.0
  %325 = vmatpush1.msra.mxu0 0.0
  %326 = vmatprep.subr.mxu0 0.0
  %327 = vmatpush1.msra.mxu0 0.0
  %328 = vmatprep.mubr.f32.mxu0 0.0
  %329 = vmatmul.mubr.f32.gmra.mrb[0].mxu0 %v262
  %v330 = vpop.f32.mrb[0].mxu0
  %v331 = vadd.f32 0.0, %v330
  %v332 = vpop.f32.mrb[0].mxu0
  %333 = vdwg.mxu0
  %334 = vrot.lane.b32.xlu0 %v100, 96
  %v335 = vpop.permute.xlu0 %334
  %v338 = vsel %vm260, %v254, 0
  %340 = vmatprep.subr.mxu0 0.0
  %341 = vmatpush1.msra.mxu0 %v335
  %342 = vmatprep.subr.mxu0 0.0
  %343 = vmatpush1.msra.mxu0 0.0
  %344 = vmatprep.subr.mxu0 0.0
  %345 = vmatpush1.msra.mxu0 0.0
  %346 = vmatprep.subr.mxu0 0.0
  %347 = vmatpush1.msra.mxu0 0.0
  %348 = vmatprep.subr.mxu0 0.0
  %349 = vmatpush1.msra.mxu0 0.0
  %350 = vmatprep.subr.mxu0 0.0
  %351 = vmatpush1.msra.mxu0 0.0
  %352 = vmatprep.subr.mxu0 0.0
  %353 = vmatpush1.msra.mxu0 0.0
  %354 = vmatprep.subr.mxu0 0.0
  %355 = vmatpush1.msra.mxu0 0.0
  %356 = vmatprep.subr.mxu0 0.0
  %357 = vmatpush1.msra.mxu0 0.0
  %358 = vmatprep.subr.mxu0 0.0
  %359 = vmatpush1.msra.mxu0 0.0
  %360 = vmatprep.subr.mxu0 0.0
  %361 = vmatpush1.msra.mxu0 0.0
  %362 = vmatprep.subr.mxu0 0.0
  %363 = vmatpush1.msra.mxu0 0.0
  %364 = vmatprep.subr.mxu0 0.0
  %365 = vmatpush1.msra.mxu0 0.0
  %366 = vmatprep.subr.mxu0 0.0
  %367 = vmatpush1.msra.mxu0 0.0
  %368 = vmatprep.subr.mxu0 0.0
  %369 = vmatpush1.msra.mxu0 0.0
  %370 = vmatprep.subr.mxu0 0.0
  %371 = vmatpush1.msra.mxu0 0.0
  %372 = vmatprep.subr.mxu0 0.0
  %373 = vmatpush1.msra.mxu0 0.0
  %374 = vmatprep.subr.mxu0 0.0
  %375 = vmatpush1.msra.mxu0 0.0
  %376 = vmatprep.subr.mxu0 0.0
  %377 = vmatpush1.msra.mxu0 0.0
  %378 = vmatprep.subr.mxu0 0.0
  %379 = vmatpush1.msra.mxu0 0.0
  %380 = vmatprep.subr.mxu0 0.0
  %381 = vmatpush1.msra.mxu0 0.0
  %382 = vmatprep.subr.mxu0 0.0
  %383 = vmatpush1.msra.mxu0 0.0
  %384 = vmatprep.subr.mxu0 0.0
  %385 = vmatpush1.msra.mxu0 0.0
  %386 = vmatprep.subr.mxu0 0.0
  %387 = vmatpush1.msra.mxu0 0.0
  %388 = vmatprep.subr.mxu0 0.0
  %389 = vmatpush1.msra.mxu0 0.0
  %390 = vmatprep.subr.mxu0 0.0
  %391 = vmatpush1.msra.mxu0 0.0
  %392 = vmatprep.subr.mxu0 0.0
  %393 = vmatpush1.msra.mxu0 0.0
  %394 = vmatprep.subr.mxu0 0.0
  %395 = vmatpush1.msra.mxu0 0.0
  %396 = vmatprep.subr.mxu0 0.0
  %397 = vmatpush1.msra.mxu0 0.0
  %398 = vmatprep.subr.mxu0 0.0
  %399 = vmatpush1.msra.mxu0 0.0
  %400 = vmatprep.subr.mxu0 0.0
  %401 = vmatpush1.msra.mxu0 0.0
  %402 = vmatprep.subr.mxu0 0.0
  %403 = vmatpush1.msra.mxu0 0.0
  %404 = vmatprep.mubr.f32.mxu0 0.0
  %405 = vmatmul.mubr.f32.gmra.mrb[0].mxu0 %v338
  %v406 = vpop.f32.mrb[0].mxu0
  %v407 = vadd.f32 0.0, %v406
  %v408 = vpop.f32.mrb[0].mxu0
  %409 = vdwg.mxu0
  %v410 = vld [vmem:[%s2] sm:$0xff]
  %v411 = vld [vmem:[%s2 + $0x8] sm:$0xff]
  %v413 = vsel %vm21, %v331, 0
  %v416 = vsel %vm21, %v407, 0
  %418 = vmatprep.subr.mxu0 0.0
  %419 = vmatpush1.msra.mxu0 %v410
  %420 = vmatprep.subr.mxu0 0.0
  %421 = vmatpush1.msra.mxu0 %v411
  %422 = vmatprep.subr.mxu0 0.0
  %423 = vmatpush1.msra.mxu0 0.0
  %424 = vmatprep.subr.mxu0 0.0
  %425 = vmatpush1.msra.mxu0 0.0
  %426 = vmatprep.subr.mxu0 0.0
  %427 = vmatpush1.msra.mxu0 0.0
  %428 = vmatprep.subr.mxu0 0.0
  %429 = vmatpush1.msra.mxu0 0.0
  %430 = vmatprep.subr.mxu0 0.0
  %431 = vmatpush1.msra.mxu0 0.0
  %432 = vmatprep.subr.mxu0 0.0
  %433 = vmatpush1.msra.mxu0 0.0
  %434 = vmatprep.subr.mxu0 0.0
  %435 = vmatpush1.msra.mxu0 0.0
  %436 = vmatprep.subr.mxu0 0.0
  %437 = vmatpush1.msra.mxu0 0.0
  %438 = vmatprep.subr.mxu0 0.0
  %439 = vmatpush1.msra.mxu0 0.0
  %440 = vmatprep.subr.mxu0 0.0
  %441 = vmatpush1.msra.mxu0 0.0
  %442 = vmatprep.subr.mxu0 0.0
  %443 = vmatpush1.msra.mxu0 0.0
  %444 = vmatprep.subr.mxu0 0.0
  %445 = vmatpush1.msra.mxu0 0.0
  %446 = vmatprep.subr.mxu0 0.0
  %447 = vmatpush1.msra.mxu0 0.0
  %448 = vmatprep.subr.mxu0 0.0
  %449 = vmatpush1.msra.mxu0 0.0
  %450 = vmatprep.subr.mxu0 0.0
  %451 = vmatpush1.msra.mxu0 0.0
  %452 = vmatprep.subr.mxu0 0.0
  %453 = vmatpush1.msra.mxu0 0.0
  %454 = vmatprep.subr.mxu0 0.0
  %455 = vmatpush1.msra.mxu0 0.0
  %456 = vmatprep.subr.mxu0 0.0
  %457 = vmatpush1.msra.mxu0 0.0
  %458 = vmatprep.subr.mxu0 0.0
  %459 = vmatpush1.msra.mxu0 0.0
  %460 = vmatprep.subr.mxu0 0.0
  %461 = vmatpush1.msra.mxu0 0.0
  %462 = vmatprep.subr.mxu0 0.0
  %463 = vmatpush1.msra.mxu0 0.0
  %464 = vmatprep.subr.mxu0 0.0
  %465 = vmatpush1.msra.mxu0 0.0
  %466 = vmatprep.subr.mxu0 0.0
  %467 = vmatpush1.msra.mxu0 0.0
  %468 = vmatprep.subr.mxu0 0.0
  %469 = vmatpush1.msra.mxu0 0.0
  %470 = vmatprep.subr.mxu0 0.0
  %471 = vmatpush1.msra.mxu0 0.0
  %472 = vmatprep.subr.mxu0 0.0
  %473 = vmatpush1.msra.mxu0 0.0
  %474 = vmatprep.subr.mxu0 0.0
  %475 = vmatpush1.msra.mxu0 0.0
  %476 = vmatprep.subr.mxu0 0.0
  %477 = vmatpush1.msra.mxu0 0.0
  %478 = vmatprep.subr.mxu0 0.0
  %479 = vmatpush1.msra.mxu0 0.0
  %480 = vmatprep.subr.mxu0 0.0
  %481 = vmatpush1.msra.mxu0 0.0
  %482 = vmatprep.mubr.f32.mxu0 0.0
  %483 = vmatmul.mubr.f32.gmra.mrb[0].mxu0 %v413
  %v484 = vpop.f32.mrb[0].mxu0
  %v485 = vadd.f32 0.0, %v484
  %v486 = vpop.f32.mrb[0].mxu0
  %487 = vmatprep.mubr.f32.mxu0 0.0
  %488 = vmatmul.mubr.f32.gmra.mrb[0].mxu0 %v416
  %v489 = vpop.f32.mrb[0].mxu0
  %v490 = vadd.f32 0.0, %v489
  %v491 = vpop.f32.mrb[0].mxu0
  %492 = vdwg.mxu0
  %v493 = vmax.f32 %v485, 0.0
  %v494 = vmax.f32 %v490, 0.0
  %v495 = vld [vmem:[%s3] sm:$0x3f]
  %vm496 = vcmask 523264
  %v498 = vsel %vm496, %v493, 0
  %v501 = vsel %vm496, %v494, 0
  %v504 = vsel %vm496, %v495, 0
  %506 = vmatprep.subr.mxu0 0.0
  %507 = vmatpush1.xpose.msra.mxu0 %v504
  %508 = vmatprep.subr.mxu0 0.0
  %509 = vmatpush1.xpose.msra.mxu0 0.0
  %510 = vmatprep.subr.mxu0 0.0
  %511 = vmatpush1.xpose.msra.mxu0 0.0
  %512 = vmatprep.subr.mxu0 0.0
  %513 = vmatpush1.xpose.msra.mxu0 0.0
  %514 = vmatprep.subr.mxu0 0.0
  %515 = vmatpush1.xpose.msra.mxu0 0.0
  %516 = vmatprep.subr.mxu0 0.0
  %517 = vmatpush1.xpose.msra.mxu0 0.0
  %518 = vmatprep.subr.mxu0 0.0
  %519 = vmatpush1.xpose.msra.mxu0 0.0
  %520 = vmatprep.subr.mxu0 0.0
  %521 = vmatpush1.xpose.msra.mxu0 0.0
  %522 = vmatprep.subr.mxu0 0.0
  %523 = vmatpush1.xpose.msra.mxu0 0.0
  %524 = vmatprep.subr.mxu0 0.0
  %525 = vmatpush1.xpose.msra.mxu0 0.0
  %526 = vmatprep.subr.mxu0 0.0
  %527 = vmatpush1.xpose.msra.mxu0 0.0
  %528 = vmatprep.subr.mxu0 0.0
  %529 = vmatpush1.xpose.msra.mxu0 0.0
  %530 = vmatprep.subr.mxu0 0.0
  %531 = vmatpush1.xpose.msra.mxu0 0.0
  %532 = vmatprep.subr.mxu0 0.0
  %533 = vmatpush1.xpose.msra.mxu0 0.0
  %534 = vmatprep.subr.mxu0 0.0
  %535 = vmatpush1.xpose.msra.mxu0 0.0
  %536 = vmatprep.subr.mxu0 0.0
  %537 = vmatpush1.xpose.msra.mxu0 0.0
  %538 = vmatprep.subr.mxu0 0.0
  %539 = vmatpush1.xpose.msra.mxu0 0.0
  %540 = vmatprep.subr.mxu0 0.0
  %541 = vmatpush1.xpose.msra.mxu0 0.0
  %542 = vmatprep.subr.mxu0 0.0
  %543 = vmatpush1.xpose.msra.mxu0 0.0
  %544 = vmatprep.subr.mxu0 0.0
  %545 = vmatpush1.xpose.msra.mxu0 0.0
  %546 = vmatprep.subr.mxu0 0.0
  %547 = vmatpush1.xpose.msra.mxu0 0.0
  %548 = vmatprep.subr.mxu0 0.0
  %549 = vmatpush1.xpose.msra.mxu0 0.0
  %550 = vmatprep.subr.mxu0 0.0
  %551 = vmatpush1.xpose.msra.mxu0 0.0
  %552 = vmatprep.subr.mxu0 0.0
  %553 = vmatpush1.xpose.msra.mxu0 0.0
  %554 = vmatprep.subr.mxu0 0.0
  %555 = vmatpush1.xpose.msra.mxu0 0.0
  %556 = vmatprep.subr.mxu0 0.0
  %557 = vmatpush1.xpose.msra.mxu0 0.0
  %558 = vmatprep.subr.mxu0 0.0
  %559 = vmatpush1.xpose.msra.mxu0 0.0
  %560 = vmatprep.subr.mxu0 0.0
  %561 = vmatpush1.xpose.msra.mxu0 0.0
  %562 = vmatprep.subr.mxu0 0.0
  %563 = vmatpush1.xpose.msra.mxu0 0.0
  %564 = vmatprep.subr.mxu0 0.0
  %565 = vmatpush1.xpose.msra.mxu0 0.0
  %566 = vmatprep.subr.mxu0 0.0
  %567 = vmatpush1.xpose.msra.mxu0 0.0
  %568 = vmatprep.subr.mxu0 0.0
  %569 = vmatpush1.xpose.msra.mxu0 0.0
  %570 = vmatprep.mubr.f32.mxu0 0.0
  %571 = vmatmul.mubr.f32.gmra.mrb[0].mxu0 %v498
  %v572 = vpop.f32.mrb[0].mxu0
  %v573 = vadd.f32 0.0, %v572
  %v574 = vpop.f32.mrb[0].mxu0
  %575 = vmatprep.mubr.f32.mxu0 0.0
  %576 = vmatmul.mubr.f32.gmra.mrb[0].mxu0 %v501
  %v577 = vpop.f32.mrb[0].mxu0
  %v578 = vadd.f32 0.0, %v577
  %v579 = vpop.f32.mrb[0].mxu0
  %580 = vdwg.mxu0
  %vm581 = vcmask 48128
  %582 = vst.msk [vmem:[%s4] sm:$0xff] %vm581, %v573
  %583 = vst.msk [vmem:[%s4 + $0x8] sm:$0xff] %vm581, %v578
  // Predicated region
  $region18: #{basic_transformer_block.1} parent=0 // pred_check
    _
  $region19: #{basic_transformer_block.1} parent=0 // pred_check_branch
    %585 = sbr.rel (0) target = $region21
  $region20: #{basic_transformer_block.1} parent=0 // pred_region
    _
  $region21: #{basic_transformer_block.1} parent=0 // pred_fallthru
    _
  // Predicated region
  $region22: #{basic_transformer_block.1} parent=0 // pred_check
    _
  $region23: #{basic_transformer_block.1} parent=0 // pred_check_branch
    %587 = sbr.rel (0) target = $region25
  $region24: #{basic_transformer_block.1} parent=0 // pred_region
    _
  $region25: #{basic_transformer_block.1} parent=0 // pred_fallthru
    _

</llo_original>
